<compile_context>
chip_gen: v5e
topology: v5e:2x2
jax: 0.10.0
libtpu: 0.0.40
codegen_flags: <defaults>
</compile_context>

<pallas_src>
import functools

import jax
import jax.numpy as jnp
from jax import lax
from jax.experimental import pallas as pl
from jax.experimental.pallas import tpu as pltpu

_LANES = 128
_SUBLANES = 8
_TILE_ROWS = 1024          # 1024 x 128 x f32 = 512 KiB per input block
_NUM_CORES = 2             # leading "parallel" grid axis (uses both TCs on v7x)


def _round_up(a, b):
    return ((a + b - 1) // b) * b


def _charbonnier_kernel(x_ref, y_ref, out_ref, *, eps2, n_elems, tile_rows,
                        blocks_per_core):
    c = pl.program_id(0)          # core / partial index
    i = pl.program_id(1)          # block index within this core's stream

    @pl.when(i == 0)
    def _init():
        out_ref[...] = jnp.zeros_like(out_ref)

    # Flat-index mask covering the ragged tail, wrapper padding and any
    # duplicated (clamped) block on the second core.
    gblock = c * blocks_per_core + i
    base = gblock * (tile_rows * _LANES)
    row = lax.broadcasted_iota(jnp.int32, (tile_rows, _LANES), 0)
    lane = lax.broadcasted_iota(jnp.int32, (tile_rows, _LANES), 1)
    valid = (base + row * _LANES + lane) < n_elems

    d = x_ref[...].astype(jnp.float32) - y_ref[...].astype(jnp.float32)
    val = jnp.where(valid, jnp.sqrt(d * d + eps2), 0.0)

    # Lane-parallel accumulation: fold (tile_rows,128) -> (8,128) with pure
    # VPU adds into the resident output block (no per-step cross-lane reduce).
    out_ref[...] += jnp.sum(
        val.reshape(tile_rows // _SUBLANES, _SUBLANES, _LANES), axis=0)


def charbonnier_loss(x, y, eps=1e-3):
    assert x.shape == y.shape, "x and y must have the same shape"
    n = x.size
    assert n > 0, "empty inputs"

    xf = x.reshape(-1)
    yf = y.reshape(-1)

    # Pad (only when needed) so the flat buffers reshape to an (8,128)-aligned
    # slab; padded elements are masked out inside the kernel.
    padded = _round_up(n, _SUBLANES * _LANES)
    if padded != n:
        xf = jnp.pad(xf, (0, padded - n))
        yf = jnp.pad(yf, (0, padded - n))
    rows = padded // _LANES
    x2d = xf.reshape(rows, _LANES)
    y2d = yf.reshape(rows, _LANES)

    tile_rows = min(_TILE_ROWS, rows)          # both are multiples of 8
    nblocks = pl.cdiv(rows, tile_rows)
    bpc = pl.cdiv(nblocks, _NUM_CORES)         # blocks per core

    def in_map(c, i):
        # Clamp so an over-hanging (fully masked-out) step never indexes OOB.
        return (jnp.minimum(c * bpc + i, nblocks - 1), 0)

    kernel = functools.partial(
        _charbonnier_kernel,
        eps2=float(eps) * float(eps),
        n_elems=int(n),
        tile_rows=int(tile_rows),
        blocks_per_core=int(bpc),
    )

    partials = pl.pallas_call(
        kernel,
        out_shape=jax.ShapeDtypeStruct((_NUM_CORES, _SUBLANES, _LANES),
                                       jnp.float32),
        grid_spec=pltpu.PrefetchScalarGridSpec(
            num_scalar_prefetch=0,
            grid=(_NUM_CORES, bpc),
            in_specs=[
                pl.BlockSpec((tile_rows, _LANES), in_map),
                pl.BlockSpec((tile_rows, _LANES), in_map),
            ],
            out_specs=pl.BlockSpec((None, _SUBLANES, _LANES),
                                   lambda c, i: (c, 0, 0)),
        ),
        compiler_params=pltpu.CompilerParams(
            dimension_semantics=("parallel", "arbitrary"),
        ),
    )(x2d, y2d)

    # Tiny final reduction (2*8*128 f32) + mean scaling in XLA.
    return jnp.sum(partials) / jnp.float32(n)


def charbonnier_loss_ref(x, y, eps=1e-3):
    d = x.astype(jnp.float32) - y.astype(jnp.float32)
    return jnp.mean(jnp.sqrt(d * d + eps * eps))


if __name__ == "__main__":
    key = jax.random.PRNGKey(0)
    kx, ky = jax.random.split(key)

    # NCHW inputs typical of the image-restoration use of this loss.
    x = jax.random.normal(kx, (2, 4, 16, 16), dtype=jnp.float32)
    y = jax.random.normal(ky, (2, 4, 16, 16), dtype=jnp.float32)
    loss = jax.block_until_ready(charbonnier_loss(x, y, eps=1e-3))
    ref = jax.block_until_ready(charbonnier_loss_ref(x, y, eps=1e-3))
    assert jnp.allclose(loss, ref, rtol=1e-5, atol=1e-6), (loss, ref)

    # Ragged case (numel not a multiple of 8*128) exercises in-kernel masking.
    xr = jax.random.normal(kx, (2, 3, 7, 9), dtype=jnp.float32)
    yr = jax.random.normal(ky, (2, 3, 7, 9), dtype=jnp.float32)
    loss_r = jax.block_until_ready(charbonnier_loss(xr, yr, eps=1e-3))
    ref_r = jax.block_until_ready(charbonnier_loss_ref(xr, yr, eps=1e-3))
    assert jnp.allclose(loss_r, ref_r, rtol=1e-5, atol=1e-6), (loss_r, ref_r)

    print("KERNEL_OK")
</pallas_src>

<mosaic_0001>
module attributes {stable_mosaic.version = 11 : i64} {
  func.func @_charbonnier_kernel(%arg0: i32, %arg1: i32, %arg2: memref<16x128xf32, #tpu.memory_space<vmem>>, %arg3: memref<16x128xf32, #tpu.memory_space<vmem>>, %arg4: memref<1x8x128xf32, #tpu.memory_space<vmem>>) attributes {dimension_semantics = [#tpu.dimension_semantics<parallel>, #tpu.dimension_semantics<arbitrary>], iteration_bounds = array<i64: 2, 1>, scalar_prefetch = 0 : i64, scratch_operands = 0 : i64, tpu.core_type = #tpu.core_type<tc>, window_params = [{transform_indices = @transform_0, window_bounds = array<i64: 16, 128>}, {transform_indices = @transform_1, window_bounds = array<i64: 16, 128>}, {transform_indices = @transform_2, window_bounds = array<i64: 1, 8, 128>}]} {
    %c0_i32 = arith.constant 0 : i32
    %0 = arith.cmpi eq, %arg1, %c0_i32 : i32
    %1 = arith.extui %0 : i1 to i32
    %c0_i32_0 = arith.constant 0 : i32
    %2 = arith.cmpi ne, %1, %c0_i32_0 : i32
    scf.if %2 {
      %cst_13 = arith.constant 0.000000e+00 : f32
      %32 = vector.broadcast %cst_13 : f32 to vector<8x128xf32>
      %c0_14 = arith.constant 0 : index
      %c0_15 = arith.constant 0 : index
      %c0_16 = arith.constant 0 : index
      %33 = vector.load %arg4[%c0_14, %c0_15, %c0_16] : memref<1x8x128xf32, #tpu.memory_space<vmem>>, vector<1x8x128xf32>
      %34 = vector.shape_cast %33 : vector<1x8x128xf32> to vector<8x128xf32>
      %35 = vector.shape_cast %32 : vector<8x128xf32> to vector<1x8x128xf32>
      tpu.vector_store %arg4[%c0_14, %c0_15, %c0_16], %35 {strides = array<i32>} : memref<1x8x128xf32, #tpu.memory_space<vmem>>, vector<1x8x128xf32>,
    } else {
    }
    %c1_i32 = arith.constant 1 : i32
    %3 = arith.muli %arg0, %c1_i32 : i32
    %4 = arith.addi %3, %arg1 : i32
    %c2048_i32 = arith.constant 2048 : i32
    %5 = arith.muli %4, %c2048_i32 : i32
    %6 = tpu.iota {dimensions = array<i32: 0>} : vector<16x128xi32>
    %7 = tpu.iota {dimensions = array<i32: 1>} : vector<16x128xi32>
    %c128_i32 = arith.constant 128 : i32
    %8 = vector.broadcast %c128_i32 : i32 to vector<16x128xi32>
    %9 = arith.muli %6, %8 : vector<16x128xi32>
    %10 = vector.broadcast %5 : i32 to vector<16x128xi32>
    %11 = arith.addi %10, %9 : vector<16x128xi32>
    %12 = arith.addi %11, %7 : vector<16x128xi32>
    %c2048_i32_1 = arith.constant 2048 : i32
    %13 = vector.broadcast %c2048_i32_1 : i32 to vector<16x128xi32>
    %14 = arith.cmpi slt, %12, %13 : vector<16x128xi32>
    %c0 = arith.constant 0 : index
    %c0_2 = arith.constant 0 : index
    %15 = vector.load %arg2[%c0, %c0_2] : memref<16x128xf32, #tpu.memory_space<vmem>>, vector<16x128xf32>
    %c0_3 = arith.constant 0 : index
    %c0_4 = arith.constant 0 : index
    %16 = vector.load %arg3[%c0_3, %c0_4] : memref<16x128xf32, #tpu.memory_space<vmem>>, vector<16x128xf32>
    %17 = arith.subf %15, %16 : vector<16x128xf32>
    %18 = arith.mulf %17, %17 : vector<16x128xf32>
    %cst = arith.constant 9.99999997E-7 : f32
    %19 = vector.broadcast %cst : f32 to vector<16x128xf32>
    %20 = arith.addf %18, %19 : vector<16x128xf32>
    %21 = math.sqrt %20 : vector<16x128xf32>
    %cst_5 = arith.constant 0.000000e+00 : f32
    %22 = vector.broadcast %cst_5 : f32 to vector<16x128xf32>
    %23 = arith.select %14, %21, %22 : vector<16x128xi1>, vector<16x128xf32>
    %c0_6 = arith.constant 0 : index
    %c0_7 = arith.constant 0 : index
    %c0_8 = arith.constant 0 : index
    %24 = vector.load %arg4[%c0_6, %c0_7, %c0_8] : memref<1x8x128xf32, #tpu.memory_space<vmem>>, vector<1x8x128xf32>
    %25 = vector.shape_cast %24 : vector<1x8x128xf32> to vector<8x128xf32>
    %26 = vector.shape_cast %23 : vector<16x128xf32> to vector<2x8x128xf32>
    %cst_9 = arith.constant dense<0.000000e+00> : vector<8x128xf32>
    %27 = vector.multi_reduction <add>, %26, %cst_9 [0] : vector<2x8x128xf32> to vector<8x128xf32>
    %28 = arith.addf %25, %27 : vector<8x128xf32>
    %c0_10 = arith.constant 0 : index
    %c0_11 = arith.constant 0 : index
    %c0_12 = arith.constant 0 : index
    %29 = vector.load %arg4[%c0_10, %c0_11, %c0_12] : memref<1x8x128xf32, #tpu.memory_space<vmem>>, vector<1x8x128xf32>
    %30 = vector.shape_cast %29 : vector<1x8x128xf32> to vector<8x128xf32>
    %31 = vector.shape_cast %28 : vector<8x128xf32> to vector<1x8x128xf32>
    tpu.vector_store %arg4[%c0_10, %c0_11, %c0_12], %31 {strides = array<i32>} : memref<1x8x128xf32, #tpu.memory_space<vmem>>, vector<1x8x128xf32>,
    return
  }
  func.func @transform_0(%arg0: i32, %arg1: i32) -> (i32, i32) {
    %c1_i32 = arith.constant 1 : i32
    %0 = arith.muli %arg0, %c1_i32 : i32
    %1 = arith.addi %0, %arg1 : i32
    %c0_i32 = arith.constant 0 : i32
    %2 = arith.minsi %1, %c0_i32 : i32
    %c0_i32_0 = arith.constant 0 : i32
    %c0_i32_1 = arith.constant 0 : i32
    return %2, %c0_i32_0 : i32, i32
  }
  func.func @transform_1(%arg0: i32, %arg1: i32) -> (i32, i32) {
    %c1_i32 = arith.constant 1 : i32
    %0 = arith.muli %arg0, %c1_i32 : i32
    %1 = arith.addi %0, %arg1 : i32
    %c0_i32 = arith.constant 0 : i32
    %2 = arith.minsi %1, %c0_i32 : i32
    %c0_i32_0 = arith.constant 0 : i32
    %c0_i32_1 = arith.constant 0 : i32
    return %2, %c0_i32_0 : i32, i32
  }
  func.func @transform_2(%arg0: i32, %arg1: i32) -> (i32, i32, i32) {
    %c0_i32 = arith.constant 0 : i32
    %c0_i32_0 = arith.constant 0 : i32
    %c0_i32_1 = arith.constant 0 : i32
    return %arg0, %c0_i32, %c0_i32_0 : i32, i32, i32
  }
}

</mosaic_0001>

<llo_original>
// kernel: tpu_custom_call.1
$region0: #{tpu_custom_call.1}
  #allocation0 [shape = 'u32[]', space=smem, size = 0x4, offset = 0x4, fixed_abs, tag = 'smem constant byte address 0x4 - core index']
  #allocation1 [shape = 'u32[72,128]{1,0:T(1,128)}', space=vmem, size = 0x9000, scoped, tag = 'internal scratch']
  %s0 = inlined_call_operand.hbm [shape: f32[16,128], index: 0, kind: input, shape index: {}]
  %s1 = inlined_call_operand.hbm [shape: f32[16,128], index: 1, kind: input, shape index: {}]
  %s2 = inlined_call_operand.hbm [shape: f32[2,8,128], index: 2, kind: output, shape index: {}]
  %s3 = sld [smem:[#allocation0]]
  $region53: #{tpu_custom_call.1} parent=0
    _
  %s5 = ssub.s32 1, %s3
  %s6 = scalar_select 0, %s5, %s3
  $region1: #{tpu_custom_call.1} parent=0
    #allocation2 [shape = 'u8[16384]{0}', space=vmem, size = 0x4000, scoped, tag = 'input window, operand 0']
    #allocation3 [shape = 's32[2]{0}', space=sflag, size = 0x8, scoped, tag = 'scoped memory for tpu_custom_call.1']
    #allocation4 [shape = 's32[2]{0}', space=sflag, size = 0x8, scoped, tag = 'scoped memory for tpu_custom_call.1']
    #allocation5 [shape = 'u8[16384]{0}', space=vmem, size = 0x4000, scoped, tag = 'input window, operand 1']
    #allocation6 [shape = 's32[2]{0}', space=sflag, size = 0x8, scoped, tag = 'scoped memory for tpu_custom_call.1']
    #allocation7 [shape = 'u8[8192]{0}', space=vmem, size = 0x2000, scoped, tag = 'output window, operand 0']
    %7 = vsyncpa [#allocation3], 0
    %s8 = scalar_lea.sflag [#allocation3], 1
    %9 = vsyncpa %s8, 0
    %10 = vsyncpa [#allocation6], 0
    %s11 = scalar_lea.sflag [#allocation6], 1
    %12 = vsyncpa %s11, 0
    %13 = vsyncpa [#allocation4], 0
    %s14 = scalar_lea.sflag [#allocation4], 1
    %15 = vsyncpa %s14, 0
    loop: start=0, step=1, limit=4
    $region2: #{tpu_custom_call.1} parent=1 // loop_pre_header
      _
    $region3: #{tpu_custom_call.1} parent=1 // loop_header
      %s17 = sphi 0, %s21
      %p18 = scmp.ge.s32.totalorder %s17, 4
      %s24 = sphi 0, %s36
      %s25 = sphi 0, %s32
      %s26 = sphi 0, %s24
      %s27 = sphi 0, %s25
      %s28 = sphi 0, %s26
      %s29 = sphi 0, %s27
      %s45 = sphi 0, %s47
      %s48 = sphi 0, %s45
      %s49 = sphi 0, %s48
      %s65 = sphi 0, %s49
      %s77 = sphi 0, %s79
      %s80 = sphi 0, %s77
      %s81 = sphi 0, %s80
      %s97 = sphi 0, %s81
      %s103 = sphi 0, %s105
      %s106 = sphi 0, %s103
      %s107 = sphi 0, %s106
      %s123 = sphi 0, %s107
    $region4: #{tpu_custom_call.1} parent=1 // loop_header_branch
      %20 = sbr.rel (%p18) target = $region8
    $region5: #{tpu_custom_call.1} parent=1 // loop_body
      %s22 = ssub.s32 %s17, 1
      %s23 = ssub.s32 %s17, 2
      %s30 = sadd.s32 1, %s25
      %p31 = scmp.ge.s32.totalorder %s30, 1
      %s32 = scalar_select %p31, 0, %s30
      %s33 = sadd.s32 1, %s24
      %s34 = scalar_select %p31, %s33, %s24
      %p35 = scmp.ge.s32.totalorder %s34, 2
      %s36 = scalar_select %p35, 0, %s34
      %s37 = sadd.s32 %s24, %s25
      %p38 = scmp.lt.s32.totalorder %s37, 0
      %s39 = scalar_select %p38, %s37, 0
      %s40 = sadd.s32 %s36, %s32
      %p41 = scmp.lt.s32.totalorder %s40, 0
      %s42 = scalar_select %p41, %s40, 0
      %s43 = ssub.s32 %s39, %s42
      %p44 = scmp.eq.s32.totalorder %s43, 0
      %s46 = sadd.s32 %s45, 1
      %s47 = scalar_select %p44, %s45, %s46
      %p50 = pneg %p44
      %p51 = scmp.eq.s32.totalorder %s17, 1
      %p52 = por %p50, %p51
      %p53 = scmp.ne.s32.totalorder %s45, %s48
      %p54 = scmp.eq.s32.totalorder %s17, 0
      %p55 = por %p53, %p54
      %p56 = scmp.ne.s32.totalorder %s45, %s48
      %p57 = scmp.eq.s32.totalorder %s22, 1
      %p58 = por %p56, %p57
      %p59 = scmp.ne.s32.totalorder %s48, %s49
      %p60 = scmp.eq.s32.totalorder %s22, 0
      %p61 = por %p59, %p60
      %p62 = scmp.ne.s32.totalorder %s48, %s49
      %p63 = scmp.eq.s32.totalorder %s23, 1
      %p64 = por %p62, %p63
      %p66 = scmp.ne.s32.totalorder %s49, %s65
      %p67 = scmp.eq.s32.totalorder %s23, 0
      %p68 = por %p66, %p67
      %s69 = sadd.s32 %s24, %s25
      %p70 = scmp.lt.s32.totalorder %s69, 0
      %s71 = scalar_select %p70, %s69, 0
      %s72 = sadd.s32 %s36, %s32
      %p73 = scmp.lt.s32.totalorder %s72, 0
      %s74 = scalar_select %p73, %s72, 0
      %s75 = ssub.s32 %s71, %s74
      %p76 = scmp.eq.s32.totalorder %s75, 0
      %s78 = sadd.s32 %s77, 1
      %s79 = scalar_select %p76, %s77, %s78
      %p82 = pneg %p76
      %p83 = scmp.eq.s32.totalorder %s17, 1
      %p84 = por %p82, %p83
      %p85 = scmp.ne.s32.totalorder %s77, %s80
      %p86 = scmp.eq.s32.totalorder %s17, 0
      %p87 = por %p85, %p86
      %p88 = scmp.ne.s32.totalorder %s77, %s80
      %p89 = scmp.eq.s32.totalorder %s22, 1
      %p90 = por %p88, %p89
      %p91 = scmp.ne.s32.totalorder %s80, %s81
      %p92 = scmp.eq.s32.totalorder %s22, 0
      %p93 = por %p91, %p92
      %p94 = scmp.ne.s32.totalorder %s80, %s81
      %p95 = scmp.eq.s32.totalorder %s23, 1
      %p96 = por %p94, %p95
      %p98 = scmp.ne.s32.totalorder %s81, %s97
      %p99 = scmp.eq.s32.totalorder %s23, 0
      %p100 = por %p98, %p99
      %s101 = ssub.s32 %s24, %s36
      %p102 = scmp.eq.s32.totalorder %s101, 0
      %s104 = sadd.s32 %s103, 1
      %s105 = scalar_select %p102, %s103, %s104
      %p108 = pneg %p102
      %p109 = scmp.eq.s32.totalorder %s17, 1
      %p110 = por %p108, %p109
      %p111 = scmp.ne.s32.totalorder %s103, %s106
      %p112 = scmp.eq.s32.totalorder %s17, 0
      %p113 = por %p111, %p112
      %p114 = scmp.ne.s32.totalorder %s103, %s106
      %p115 = scmp.eq.s32.totalorder %s22, 1
      %p116 = por %p114, %p115
      %p117 = scmp.ne.s32.totalorder %s106, %s107
      %p118 = scmp.eq.s32.totalorder %s22, 0
      %p119 = por %p117, %p118
      %p120 = scmp.ne.s32.totalorder %s106, %s107
      %p121 = scmp.eq.s32.totalorder %s23, 1
      %p122 = por %p120, %p121
      %p124 = scmp.ne.s32.totalorder %s107, %s123
      %p125 = scmp.eq.s32.totalorder %s23, 0
      %p126 = por %p124, %p125
      %p127 = scmp.le.s32.totalorder 1, %s17
      %p128 = scmp.lt.s32.totalorder %s17, 3
      %p129 = pnand %p127, %p128
      %p130 = pneg %p129
      // Predicated region
      $region9: #{tpu_custom_call.1} parent=5 // pred_check
        _
      $region10: #{tpu_custom_call.1} parent=5 // pred_check_branch
        %132 = sbr.rel (%p129) target = $region12
      $region11: #{tpu_custom_call.1} parent=5 // pred_region
        %s133 = ssub.s32 %s17, 1
      $region12: #{tpu_custom_call.1} parent=5 // pred_fallthru
        _
      %p134 = scmp.lt.s32.totalorder %s17, 2
      // Predicated region
      $region13: #{tpu_custom_call.1} parent=5 // pred_check
        %p135 = pneg %p134
      $region14: #{tpu_custom_call.1} parent=5 // pred_check_branch
        %137 = sbr.rel (%p135) target = $region16
      $region15: #{tpu_custom_call.1} parent=5 // pred_region
        // Predicated region
        $region17: #{tpu_custom_call.1} parent=15 // pred_check
          %p138 = pneg %p55
        $region18: #{tpu_custom_call.1} parent=15 // pred_check_branch
          %140 = sbr.rel (%p138) target = $region20
        $region19: #{tpu_custom_call.1} parent=15 // pred_region
          %s141 = sand.u32 %s45, 1
          %s142 = scalar_lea.sflag [#allocation3], %s141
          %s143 = sand.u32 %s45, 1
          %s144 = smul.addr %s143, 16
          %s145 = scalar_lea.vmem [#allocation2], %s144
          %s146 = sadd.s32 %s24, %s25
          %p147 = scmp.lt.s32.totalorder %s146, 0
          %s148 = scalar_select %p147, %s146, 0
          %s149 = smul.u32 2, %s148
          %151 = vsyncadd %s142, 0
          %s152 = smul.addr %s149, 8
          %s153 = scalar_lea.hbm %s0, %s152
          %s154 = sshll.u32 %s153, 4
          %s155 = int_to_ptr.hbm [resolvable:$true] %s154
          %s156 = sshll.u32 %s145, 4
          %s157 = int_to_ptr.vmem [resolvable:$true] %s156
          %162 = dma.hbm_to_vmem [thread:$0]  %s155, 256, %s157, %s142, 128, 128, 8
        $region20: #{tpu_custom_call.1} parent=15 // pred_fallthru
          _
        // Predicated region
        $region21: #{tpu_custom_call.1} parent=15 // pred_check
          %p163 = pneg %p87
        $region22: #{tpu_custom_call.1} parent=15 // pred_check_branch
          %165 = sbr.rel (%p163) target = $region24
        $region23: #{tpu_custom_call.1} parent=15 // pred_region
          %s166 = sand.u32 %s77, 1
          %s167 = scalar_lea.sflag [#allocation6], %s166
          %s168 = sand.u32 %s77, 1
          %s169 = smul.addr %s168, 16
          %s170 = scalar_lea.vmem [#allocation5], %s169
          %s171 = sadd.s32 %s24, %s25
          %p172 = scmp.lt.s32.totalorder %s171, 0
          %s173 = scalar_select %p172, %s171, 0
          %s174 = smul.u32 2, %s173
          %176 = vsyncadd %s167, 0
          %s177 = smul.addr %s174, 8
          %s178 = scalar_lea.hbm %s1, %s177
          %s179 = sshll.u32 %s178, 4
          %s180 = int_to_ptr.hbm [resolvable:$true] %s179
          %s181 = sshll.u32 %s170, 4
          %s182 = int_to_ptr.vmem [resolvable:$true] %s181
          %187 = dma.hbm_to_vmem [thread:$0]  %s180, 256, %s182, %s167, 128, 128, 8
        $region24: #{tpu_custom_call.1} parent=15 // pred_fallthru
          _
      $region16: #{tpu_custom_call.1} parent=5 // pred_fallthru
        _
      %p188 = scmp.le.s32.totalorder 1, %s17
      %p189 = scmp.lt.s32.totalorder %s17, 3
      %p190 = pnand %p188, %p189
      %p191 = pneg %p190
      // Predicated region
      $region25: #{tpu_custom_call.1} parent=5 // pred_check
        _
      $region26: #{tpu_custom_call.1} parent=5 // pred_check_branch
        %193 = sbr.rel (%p190) target = $region28
      $region27: #{tpu_custom_call.1} parent=5 // pred_region
        %s194 = ssub.s32 %s17, 1
        %s195 = sand.u32 %s48, 1
        %s196 = scalar_lea.sflag [#allocation3], %s195
        %s197 = sand.u32 %s48, 1
        %s198 = smul.addr %s197, 16
        %s199 = scalar_lea.vmem [#allocation2], %s198
        // Predicated region
        $region29: #{tpu_custom_call.1} parent=27 // pred_check
          %p200 = pneg %p61
        $region30: #{tpu_custom_call.1} parent=27 // pred_check_branch
          %202 = sbr.rel (%p200) target = $region32
        $region31: #{tpu_custom_call.1} parent=27 // pred_region
          %204 = dma.done %s196, 256
        $region32: #{tpu_custom_call.1} parent=27 // pred_fallthru
          _
        %s205 = sand.u32 %s80, 1
        %s206 = scalar_lea.sflag [#allocation6], %s205
        %s207 = sand.u32 %s80, 1
        %s208 = smul.addr %s207, 16
        %s209 = scalar_lea.vmem [#allocation5], %s208
        // Predicated region
        $region33: #{tpu_custom_call.1} parent=27 // pred_check
          %p210 = pneg %p93
        $region34: #{tpu_custom_call.1} parent=27 // pred_check_branch
          %212 = sbr.rel (%p210) target = $region36
        $region35: #{tpu_custom_call.1} parent=27 // pred_region
          %214 = dma.done %s206, 256
        $region36: #{tpu_custom_call.1} parent=27 // pred_fallthru
          _
        %s215 = sand.u32 %s48, 1
        %s216 = scalar_lea.sflag [#allocation3], %s215
        %s217 = sand.u32 %s48, 1
        %s218 = smul.addr %s217, 16
        %s219 = scalar_lea.vmem [#allocation2], %s218
        %p220 = pneg %p61
        %p221 = pneg %p58
        %s222 = sand.u32 %s80, 1
        %s223 = scalar_lea.sflag [#allocation6], %s222
        %s224 = sand.u32 %s80, 1
        %s225 = smul.addr %s224, 16
        %s226 = scalar_lea.vmem [#allocation5], %s225
        %p227 = pneg %p93
        %p228 = pneg %p90
        %p229 = pneg %p119
        %p230 = pneg %p116
        %s231 = sand.u32 %s106, 1
        %s232 = scalar_lea.sflag [#allocation4], %s231
        %s233 = sand.u32 %s106, 1
        %s234 = smul.addr %s233, 8
        %s235 = scalar_lea.vmem [#allocation7], %s234
        %s236 = sadd.s32 %s26, %s27
        %p237 = scmp.lt.s32.totalorder %s236, 0
        %s238 = scalar_select %p237, %s236, 0
        %s239 = smul.u32 2, %s238
        %s240 = sadd.s32 %s26, %s27
        %p241 = scmp.lt.s32.totalorder %s240, 0
        %s242 = scalar_select %p241, %s240, 0
        %s243 = smul.u32 2, %s242
        %p244 = scmp.eq.s32.totalorder %s27, 0
        // Predicated region
        $region37: #{tpu_custom_call.1} parent=27 // pred_check
          %p245 = pneg %p244
        $region38: #{tpu_custom_call.1} parent=27 // pred_check_branch
          %247 = sbr.rel (%p245) target = $region40
        $region39: #{tpu_custom_call.1} parent=27 // pred_region
          %248 = vst [vmem:[%s235] sm:$0xff] 0.0
        $region40: #{tpu_custom_call.1} parent=27 // pred_fallthru
          _
        %s249 = sadd.s32 %s26, %s27
        %s250 = smul.u32 %s249, 2048
        %v251 = vlaneseq
        %v252 = vshrl.u32 %v251, 7
        %v253 = vadd.s32 %v252, 8
        %v254 = vlaneseq
        %v255 = vand.u32 %v254, 127
        %v256 = vmul.u32 %v252, 128
        %v257 = vmul.u32 %v253, 128
        %v258 = vstv %s250
        %v259 = vadd.s32 %v258, %v256
        %v260 = vadd.s32 %v258, %v257
        %v261 = vadd.s32 %v259, %v255
        %v262 = vadd.s32 %v260, %v255
        %vm263 = vcmp.lt.s32.totalorder %v261, 2048
        %vm264 = vcmp.lt.s32.totalorder %v262, 2048
        %v265 = vld [vmem:[%s199] sm:$0xff]
        %v266 = vld [vmem:[%s199 + $0x8] sm:$0xff]
        %v267 = vld [vmem:[%s209] sm:$0xff]
        %v268 = vld [vmem:[%s209 + $0x8] sm:$0xff]
        %v269 = vsub.f32 %v265, %v267
        %v270 = vsub.f32 %v266, %v268
        %v271 = vmul.f32 %v269, %v269
        %v272 = vmul.f32 %v270, %v270
        %v273 = vadd.f32 %v271, 1e-06
        %v274 = vadd.f32 %v272, 1e-06
        %v275 = vrsqrt.pop %v273
        %v276 = vmul.f32 %v275, %v273
        %v277 = vmul.f32 %v276, %v275
        %v278 = vmul.f32 0.5, %v277
        %v279 = vsub.f32 1.5, %v278
        %v280 = vmul.f32 %v275, %v279
        %v281 = vmul.f32 %v273, %v280
        %vm282 = vcmp.eq.f32.partialorder %v273, inf
        %v283 = vsel %vm282, %v273, %v281
        %vm284 = vcmp.eq.f32.partialorder %v273, 0.0
        %v285 = vand.u32 %v273, 2147483648
        %v286 = vsel %vm284, %v285, %v283
        %v287 = vrsqrt.pop %v274
        %v288 = vmul.f32 %v287, %v274
        %v289 = vmul.f32 %v288, %v287
        %v290 = vmul.f32 0.5, %v289
        %v291 = vsub.f32 1.5, %v290
        %v292 = vmul.f32 %v287, %v291
        %v293 = vmul.f32 %v274, %v292
        %vm294 = vcmp.eq.f32.partialorder %v274, inf
        %v295 = vsel %vm294, %v274, %v293
        %vm296 = vcmp.eq.f32.partialorder %v274, 0.0
        %v297 = vand.u32 %v274, 2147483648
        %v298 = vsel %vm296, %v297, %v295
        %v299 = vsel %vm263, %v286, 0.0
        %v300 = vsel %vm264, %v298, 0.0
        %v301 = vld [vmem:[%s235] sm:$0xff]
        %v302 = vadd.f32 %v299, %v300
        %v303 = vadd.f32 %v301, %v302
        %304 = vst [vmem:[%s235] sm:$0xff] %v303
        %s305 = sand.u32 %s106, 1
        %s306 = scalar_lea.sflag [#allocation4], %s305
        %s307 = sand.u32 %s106, 1
        %s308 = smul.addr %s307, 8
        %s309 = scalar_lea.vmem [#allocation7], %s308
        // Predicated region
        $region41: #{tpu_custom_call.1} parent=27 // pred_check
          %p310 = pneg %p116
        $region42: #{tpu_custom_call.1} parent=27 // pred_check_branch
          %312 = sbr.rel (%p310) target = $region44
        $region43: #{tpu_custom_call.1} parent=27 // pred_region
          %314 = vsyncadd %s306, 0
          %s315 = smul.addr %s26, 8
          %s316 = scalar_lea.hbm %s2, %s315
          %s318 = sshll.u32 %s309, 4
          %s319 = int_to_ptr.vmem [resolvable:$true] %s318
          %s320 = sshll.u32 %s316, 4
          %s321 = int_to_ptr.hbm [resolvable:$true] %s320
          %323 = dma.vmem_to_hbm [thread:$0]  %s319, 128, %s321, %s306
        $region44: #{tpu_custom_call.1} parent=27 // pred_fallthru
          _
      $region28: #{tpu_custom_call.1} parent=5 // pred_fallthru
        _
      %p324 = scmp.le.s32.totalorder 2, %s17
      // Predicated region
      $region45: #{tpu_custom_call.1} parent=5 // pred_check
        %p325 = pneg %p324
      $region46: #{tpu_custom_call.1} parent=5 // pred_check_branch
        %327 = sbr.rel (%p325) target = $region48
      $region47: #{tpu_custom_call.1} parent=5 // pred_region
        %s328 = ssub.s32 %s17, 2
        // Predicated region
        $region49: #{tpu_custom_call.1} parent=47 // pred_check
          %p329 = pneg %p122
        $region50: #{tpu_custom_call.1} parent=47 // pred_check_branch
          %331 = sbr.rel (%p329) target = $region52
        $region51: #{tpu_custom_call.1} parent=47 // pred_region
          %s332 = sand.u32 %s107, 1
          %s333 = scalar_lea.sflag [#allocation4], %s332
          %s334 = sand.u32 %s107, 1
          %s335 = smul.addr %s334, 8
          %s336 = scalar_lea.vmem [#allocation7], %s335
          %338 = dma.done %s333, 128
        $region52: #{tpu_custom_call.1} parent=47 // pred_fallthru
          _
      $region48: #{tpu_custom_call.1} parent=5 // pred_fallthru
        _
    $region6: #{tpu_custom_call.1} parent=1 // loop_footer
      %s21 = sadd.s32 1, %s17
    $region7: #{tpu_custom_call.1} parent=1 // loop_footer_branch
      %16 = sbr.rel target = $region3
    $region8: #{tpu_custom_call.1} parent=1 // loop_exit
      _
    %339 = vsyncpa [#allocation3], 1
    %s340 = scalar_lea.sflag [#allocation3], 1
    %341 = vsyncpa %s340, 1
    %342 = vsyncpa [#allocation6], 1
    %s343 = scalar_lea.sflag [#allocation6], 1
    %344 = vsyncpa %s343, 1
    %345 = vsyncpa [#allocation4], 1
    %s346 = scalar_lea.sflag [#allocation4], 1
    %347 = vsyncpa %s346, 1

</llo_original>
